<compile_context>
chip_gen: v5e
topology: v5e:2x2
jax: 0.10.0
libtpu: 0.0.40
codegen_flags: <defaults>
</compile_context>

<pallas_src>
import functools

import jax
import jax.numpy as jnp
from jax.experimental import pallas as pl
from jax.experimental.pallas import tpu as pltpu

LANES = 128
MAX_BLOCK_ROWS = 2048  # 2048 x 128 f32 = 1 MiB per input block


def _smooth_l1_kernel(x_ref, t_ref, out_ref, acc_ref, *,
                      beta, inv_2beta, blocks_per_part, block_rows,
                      full_rows, rem):
    p = pl.program_id(0)
    k = pl.program_id(1)

    @pl.when(k == 0)
    def _():
        acc_ref[...] = jnp.zeros_like(acc_ref)

    x = x_ref[...].astype(jnp.float32)
    t = t_ref[...].astype(jnp.float32)
    diff = jnp.abs(x - t)
    # 0.5 * d^2 / beta folded into a constant multiply (no per-element divide).
    loss = jnp.where(diff < beta, (inv_2beta * diff) * diff, diff - 0.5 * beta)

    # Mask out-of-range elements: the ragged tail of the slab and any clamped
    # (fully out-of-range) blocks coming from the two-part split.
    block_id = p * blocks_per_part + k  # un-clamped logical block id
    row = jax.lax.broadcasted_iota(jnp.int32, loss.shape, 0) + block_id * block_rows
    col = jax.lax.broadcasted_iota(jnp.int32, loss.shape, 1)
    valid = (row < full_rows) | ((row == full_rows) & (col < rem))
    loss = jnp.where(valid, loss, 0.0)

    # Partial (sublane) reduction into a lane-wide VMEM accumulator; the final
    # cross-lane reduce + divide are done once, outside the kernel.
    acc_ref[...] += jnp.sum(loss, axis=0, keepdims=True)

    @pl.when(k == pl.num_programs(1) - 1)
    def _():
        out_ref[...] = acc_ref[...]


def smooth_l1_loss(inputs, targets, beta: float = 1.0):
    """Pallas TPU implementation of torch SmoothL1Loss.forward (mean reduction)."""
    assert inputs.shape == targets.shape
    if beta < 0:
        raise ValueError("beta must be non-negative")
    n_elems = int(inputs.size)

    x = inputs.reshape(-1)
    t = targets.reshape(-1)

    # Lane-dense [rows, 128] slab. Reshape is a bitcast when n % 128 == 0; only
    # pad up to the next lane multiple otherwise (kernel masks the tail anyway).
    rem = n_elems % LANES
    if rem:
        pad = LANES - rem
        x = jnp.pad(x, (0, pad))
        t = jnp.pad(t, (0, pad))
    rows = (n_elems + LANES - 1) // LANES
    full_rows = n_elems // LANES
    x = x.reshape(rows, LANES)
    t = t.reshape(rows, LANES)

    if rows <= MAX_BLOCK_ROWS:
        block_rows = rows  # single block (block == full dim is always legal)
        total_blocks = 1
    else:
        block_rows = MAX_BLOCK_ROWS  # multiple of 8
        total_blocks = pl.cdiv(rows, block_rows)

    # Split row-blocks across two parts; the parallel axis lets v7x's two
    # TensorCores stream HBM concurrently. Harmless (serial) on v5e/v6e.
    num_parts = 2 if total_blocks >= 2 else 1
    blocks_per_part = pl.cdiv(total_blocks, num_parts)

    def in_map(p, k):
        # Clamp so no DMA is ever issued fully out of bounds; clamped blocks
        # are fully masked inside the kernel.
        return (jnp.minimum(p * blocks_per_part + k, total_blocks - 1), 0)

    kernel = functools.partial(
        _smooth_l1_kernel,
        beta=float(beta),
        inv_2beta=(0.5 / float(beta)) if beta > 0 else 0.0,
        blocks_per_part=blocks_per_part,
        block_rows=block_rows,
        full_rows=full_rows,
        rem=rem,
    )

    partials = pl.pallas_call(
        kernel,
        out_shape=jax.ShapeDtypeStruct((num_parts, LANES), jnp.float32),
        grid_spec=pltpu.PrefetchScalarGridSpec(
            num_scalar_prefetch=0,
            grid=(num_parts, blocks_per_part),
            in_specs=[
                pl.BlockSpec((block_rows, LANES), in_map),
                pl.BlockSpec((block_rows, LANES), in_map),
            ],
            out_specs=pl.BlockSpec((1, LANES), lambda p, k: (p, 0)),
            scratch_shapes=[pltpu.VMEM((1, LANES), jnp.float32)],
        ),
        compiler_params=pltpu.CompilerParams(
            dimension_semantics=("parallel", "arbitrary"),
        ),
    )(x, t)

    return jnp.sum(partials) / jnp.float32(n_elems)


if __name__ == "__main__":
    key = jax.random.PRNGKey(0)

    def reference(a, b, beta=1.0):
        d = jnp.abs(a - b)
        return jnp.mean(jnp.where(d < beta, 0.5 * d * d / beta, d - 0.5 * beta))

    # Primary example: NCHW bbox-regression-like feature maps.
    k1, k2 = jax.random.split(key)
    shape = (2, 4, 16, 16)
    inputs = jax.random.normal(k1, shape, dtype=jnp.float32)
    targets = jax.random.normal(k2, shape, dtype=jnp.float32)
    loss = smooth_l1_loss(inputs, targets, beta=1.0)
    jax.block_until_ready(loss)
    ref = reference(inputs, targets)
    assert jnp.allclose(loss, ref, rtol=1e-5, atol=1e-6), (loss, ref)

    # Extra correctness checks: a non-lane-divisible size (tail-mask path) and
    # a multi-block case exercising the two-part split + clamped tail block.
    for extra_shape in [(3, 5, 7, 11), (3, 16, 128, 128)]:
        ka, kb = jax.random.split(jax.random.fold_in(key, sum(extra_shape)))
        a = jax.random.normal(ka, extra_shape, dtype=jnp.float32)
        b = jax.random.normal(kb, extra_shape, dtype=jnp.float32)
        got = smooth_l1_loss(a, b, beta=1.0)
        jax.block_until_ready(got)
        want = reference(a, b)
        assert jnp.allclose(got, want, rtol=1e-4, atol=1e-6), (extra_shape, got, want)

    print("KERNEL_OK")
</pallas_src>

<mosaic_0001>
module attributes {stable_mosaic.version = 11 : i64} {
  func.func @_smooth_l1_kernel(%arg0: i32, %arg1: i32, %arg2: memref<16x128xf32, #tpu.memory_space<vmem>>, %arg3: memref<16x128xf32, #tpu.memory_space<vmem>>, %arg4: memref<1x128xf32, #tpu.memory_space<vmem>>, %arg5: memref<1x128xf32, #tpu.memory_space<vmem>>) attributes {dimension_semantics = [#tpu.dimension_semantics<parallel>, #tpu.dimension_semantics<arbitrary>], iteration_bounds = array<i64: 1, 1>, scalar_prefetch = 0 : i64, scratch_operands = 1 : i64, tpu.core_type = #tpu.core_type<tc>, window_params = [{transform_indices = @transform_0, window_bounds = array<i64: 16, 128>}, {transform_indices = @transform_1, window_bounds = array<i64: 16, 128>}, {transform_indices = @transform_2, window_bounds = array<i64: 1, 128>}]} {
    %c0_i32 = arith.constant 0 : i32
    %0 = arith.cmpi eq, %arg1, %c0_i32 : i32
    %1 = arith.extui %0 : i1 to i32
    %c0_i32_0 = arith.constant 0 : i32
    %2 = arith.cmpi ne, %1, %c0_i32_0 : i32
    scf.if %2 {
      %cst_17 = arith.constant 0.000000e+00 : f32
      %40 = vector.broadcast %cst_17 : f32 to vector<1x128xf32>
      %c0_18 = arith.constant 0 : index
      %c0_19 = arith.constant 0 : index
      %41 = vector.load %arg5[%c0_18, %c0_19] : memref<1x128xf32, #tpu.memory_space<vmem>>, vector<1x128xf32>
      tpu.vector_store %arg5[%c0_18, %c0_19], %40 {strides = array<i32>} : memref<1x128xf32, #tpu.memory_space<vmem>>, vector<1x128xf32>,
    } else {
    }
    %c0 = arith.constant 0 : index
    %c0_1 = arith.constant 0 : index
    %3 = vector.load %arg2[%c0, %c0_1] : memref<16x128xf32, #tpu.memory_space<vmem>>, vector<16x128xf32>
    %c0_2 = arith.constant 0 : index
    %c0_3 = arith.constant 0 : index
    %4 = vector.load %arg3[%c0_2, %c0_3] : memref<16x128xf32, #tpu.memory_space<vmem>>, vector<16x128xf32>
    %5 = arith.subf %3, %4 : vector<16x128xf32>
    %6 = math.absf %5 : vector<16x128xf32>
    %cst = arith.constant 1.000000e+00 : f32
    %7 = vector.broadcast %cst : f32 to vector<16x128xf32>
    %8 = arith.cmpf olt, %6, %7 : vector<16x128xf32>
    %cst_4 = arith.constant 5.000000e-01 : f32
    %9 = vector.broadcast %cst_4 : f32 to vector<16x128xf32>
    %10 = arith.mulf %9, %6 : vector<16x128xf32>
    %11 = arith.mulf %10, %6 : vector<16x128xf32>
    %cst_5 = arith.constant 5.000000e-01 : f32
    %12 = vector.broadcast %cst_5 : f32 to vector<16x128xf32>
    %13 = arith.subf %6, %12 : vector<16x128xf32>
    %14 = arith.select %8, %11, %13 : vector<16x128xi1>, vector<16x128xf32>
    %c1_i32 = arith.constant 1 : i32
    %15 = arith.muli %arg0, %c1_i32 : i32
    %16 = arith.addi %15, %arg1 : i32
    %17 = tpu.iota {dimensions = array<i32: 0>} : vector<16x128xi32>
    %c16_i32 = arith.constant 16 : i32
    %18 = arith.muli %16, %c16_i32 : i32
    %19 = vector.broadcast %18 : i32 to vector<16x128xi32>
    %20 = arith.addi %17, %19 : vector<16x128xi32>
    %21 = tpu.iota {dimensions = array<i32: 1>} : vector<16x128xi32>
    %c16_i32_6 = arith.constant 16 : i32
    %22 = vector.broadcast %c16_i32_6 : i32 to vector<16x128xi32>
    %23 = arith.cmpi slt, %20, %22 : vector<16x128xi32>
    %c16_i32_7 = arith.constant 16 : i32
    %24 = vector.broadcast %c16_i32_7 : i32 to vector<16x128xi32>
    %25 = arith.cmpi eq, %20, %24 : vector<16x128xi32>
    %c0_i32_8 = arith.constant 0 : i32
    %26 = vector.broadcast %c0_i32_8 : i32 to vector<16x128xi32>
    %27 = arith.cmpi slt, %21, %26 : vector<16x128xi32>
    %28 = arith.andi %25, %27 : vector<16x128xi1>
    %29 = arith.ori %23, %28 : vector<16x128xi1>
    %cst_9 = arith.constant 0.000000e+00 : f32
    %30 = vector.broadcast %cst_9 : f32 to vector<16x128xf32>
    %31 = arith.select %29, %14, %30 : vector<16x128xi1>, vector<16x128xf32>
    %c0_10 = arith.constant 0 : index
    %c0_11 = arith.constant 0 : index
    %32 = vector.load %arg5[%c0_10, %c0_11] : memref<1x128xf32, #tpu.memory_space<vmem>>, vector<1x128xf32>
    %cst_12 = arith.constant dense<0.000000e+00> : vector<128xf32>
    %33 = vector.multi_reduction <add>, %31, %cst_12 [0] : vector<16x128xf32> to vector<128xf32>
    %34 = vector.shape_cast %33 : vector<128xf32> to vector<1x128xf32>
    %35 = arith.addf %32, %34 : vector<1x128xf32>
    %c0_13 = arith.constant 0 : index
    %c0_14 = arith.constant 0 : index
    %36 = vector.load %arg5[%c0_13, %c0_14] : memref<1x128xf32, #tpu.memory_space<vmem>>, vector<1x128xf32>
    tpu.vector_store %arg5[%c0_13, %c0_14], %35 {strides = array<i32>} : memref<1x128xf32, #tpu.memory_space<vmem>>, vector<1x128xf32>,
    %c0_i32_15 = arith.constant 0 : i32
    %37 = arith.cmpi eq, %arg1, %c0_i32_15 : i32
    %38 = arith.extui %37 : i1 to i32
    %c0_i32_16 = arith.constant 0 : i32
    %39 = arith.cmpi ne, %38, %c0_i32_16 : i32
    scf.if %39 {
      %c0_17 = arith.constant 0 : index
      %c0_18 = arith.constant 0 : index
      %40 = vector.load %arg5[%c0_17, %c0_18] : memref<1x128xf32, #tpu.memory_space<vmem>>, vector<1x128xf32>
      %c0_19 = arith.constant 0 : index
      %c0_20 = arith.constant 0 : index
      %41 = vector.load %arg4[%c0_19, %c0_20] : memref<1x128xf32, #tpu.memory_space<vmem>>, vector<1x128xf32>
      tpu.vector_store %arg4[%c0_19, %c0_20], %40 {strides = array<i32>} : memref<1x128xf32, #tpu.memory_space<vmem>>, vector<1x128xf32>,
    } else {
    }
    return
  }
  func.func @transform_0(%arg0: i32, %arg1: i32) -> (i32, i32) {
    %c1_i32 = arith.constant 1 : i32
    %0 = arith.muli %arg0, %c1_i32 : i32
    %1 = arith.addi %0, %arg1 : i32
    %c0_i32 = arith.constant 0 : i32
    %2 = arith.minsi %1, %c0_i32 : i32
    %c0_i32_0 = arith.constant 0 : i32
    %c0_i32_1 = arith.constant 0 : i32
    return %2, %c0_i32_0 : i32, i32
  }
  func.func @transform_1(%arg0: i32, %arg1: i32) -> (i32, i32) {
    %c1_i32 = arith.constant 1 : i32
    %0 = arith.muli %arg0, %c1_i32 : i32
    %1 = arith.addi %0, %arg1 : i32
    %c0_i32 = arith.constant 0 : i32
    %2 = arith.minsi %1, %c0_i32 : i32
    %c0_i32_0 = arith.constant 0 : i32
    %c0_i32_1 = arith.constant 0 : i32
    return %2, %c0_i32_0 : i32, i32
  }
  func.func @transform_2(%arg0: i32, %arg1: i32) -> (i32, i32) {
    %c0_i32 = arith.constant 0 : i32
    %c0_i32_0 = arith.constant 0 : i32
    return %arg0, %c0_i32 : i32, i32
  }
}

</mosaic_0001>

<llo_original>
// kernel: tpu_custom_call.1
$region0: #{tpu_custom_call.1}
  #allocation0 [shape = 'u32[]', space=smem, size = 0x4, offset = 0x4, fixed_abs, tag = 'smem constant byte address 0x4 - core index']
  #allocation1 [shape = 'u32[72,128]{1,0:T(1,128)}', space=vmem, size = 0x9000, scoped, tag = 'internal scratch']
  #allocation2 [shape = 'f32[1,128]{1,0:T(1,128)}', space=vmem, size = 0x200, scoped, tag = 'scratch operand']
  %s0 = inlined_call_operand.hbm [shape: f32[16,128], index: 0, kind: input, shape index: {}]
  %s1 = inlined_call_operand.hbm [shape: f32[16,128], index: 1, kind: input, shape index: {}]
  %s2 = inlined_call_operand.hbm [shape: f32[1,128], index: 2, kind: output, shape index: {}]
  %s3 = sld [smem:[#allocation0]]
  $region34: #{tpu_custom_call.1} parent=0
    _
  %s5 = ssub.s32 1, %s3
  %s6 = scalar_select 0, %s5, %s3
  $region1: #{tpu_custom_call.1} parent=0
    #allocation3 [shape = 'u8[8192]{0}', space=vmem, size = 0x2000, scoped, tag = 'input window, operand 0, single buffered']
    #allocation4 [shape = 's32[1]{0}', space=sflag, size = 0x4, scoped, tag = 'scoped memory for tpu_custom_call.1']
    #allocation5 [shape = 's32[1]{0}', space=sflag, size = 0x4, scoped, tag = 'scoped memory for tpu_custom_call.1']
    #allocation6 [shape = 'u8[8192]{0}', space=vmem, size = 0x2000, scoped, tag = 'input window, operand 1, single buffered']
    #allocation7 [shape = 's32[1]{0}', space=sflag, size = 0x4, scoped, tag = 'scoped memory for tpu_custom_call.1']
    #allocation8 [shape = 'u8[512]{0}', space=vmem, size = 0x400, scoped, tag = 'output window, operand 0, single buffered']
    %7 = vsyncpa [#allocation4], 0
    %8 = vsyncpa [#allocation7], 0
    %9 = vsyncpa [#allocation5], 0
    // Predicated region
    $region2: #{tpu_custom_call.1} parent=1 // pred_check
      _
    $region3: #{tpu_custom_call.1} parent=1 // pred_check_branch
      %11 = sbr.rel (0) target = $region5
    $region4: #{tpu_custom_call.1} parent=1 // pred_region
      %s12 = sadd.s32 0, 0
      %p13 = scmp.lt.s32.totalorder %s12, 0
      %s14 = scalar_select %p13, %s12, 0
      %s15 = smul.u32 2, %s14
      %17 = vsyncadd [#allocation4], 0
      %s18 = smul.addr %s15, 8
      %s19 = scalar_lea.hbm %s0, %s18
      %s20 = sshll.u32 %s19, 4
      %s21 = int_to_ptr.hbm [resolvable:$true] %s20
      %s22 = sshll.u32 [#allocation3], 4
      %s23 = int_to_ptr.vmem [resolvable:$true] %s22
      %28 = dma.hbm_to_vmem [thread:$0]  %s21, 256, %s23, [#allocation4], 128, 128, 8
    $region5: #{tpu_custom_call.1} parent=1 // pred_fallthru
      _
    // Predicated region
    $region6: #{tpu_custom_call.1} parent=1 // pred_check
      _
    $region7: #{tpu_custom_call.1} parent=1 // pred_check_branch
      %30 = sbr.rel (0) target = $region9
    $region8: #{tpu_custom_call.1} parent=1 // pred_region
      %s31 = sadd.s32 0, 0
      %p32 = scmp.lt.s32.totalorder %s31, 0
      %s33 = scalar_select %p32, %s31, 0
      %s34 = smul.u32 2, %s33
      %36 = vsyncadd [#allocation7], 0
      %s37 = smul.addr %s34, 8
      %s38 = scalar_lea.hbm %s1, %s37
      %s39 = sshll.u32 %s38, 4
      %s40 = int_to_ptr.hbm [resolvable:$true] %s39
      %s41 = sshll.u32 [#allocation6], 4
      %s42 = int_to_ptr.vmem [resolvable:$true] %s41
      %47 = dma.hbm_to_vmem [thread:$0]  %s40, 256, %s42, [#allocation7], 128, 128, 8
    $region9: #{tpu_custom_call.1} parent=1 // pred_fallthru
      _
    // Predicated region
    $region10: #{tpu_custom_call.1} parent=1 // pred_check
      _
    $region11: #{tpu_custom_call.1} parent=1 // pred_check_branch
      %49 = sbr.rel (0) target = $region13
    $region12: #{tpu_custom_call.1} parent=1 // pred_region
      %51 = dma.done [#allocation4], 256
    $region13: #{tpu_custom_call.1} parent=1 // pred_fallthru
      _
    // Predicated region
    $region14: #{tpu_custom_call.1} parent=1 // pred_check
      _
    $region15: #{tpu_custom_call.1} parent=1 // pred_check_branch
      %53 = sbr.rel (0) target = $region17
    $region16: #{tpu_custom_call.1} parent=1 // pred_region
      %55 = dma.done [#allocation7], 256
    $region17: #{tpu_custom_call.1} parent=1 // pred_fallthru
      _
    %s56 = sadd.s32 0, 0
    %p57 = scmp.lt.s32.totalorder %s56, 0
    %s58 = scalar_select %p57, %s56, 0
    %s59 = smul.u32 2, %s58
    %s60 = sadd.s32 0, 0
    %p61 = scmp.lt.s32.totalorder %s60, 0
    %s62 = scalar_select %p61, %s60, 0
    %s63 = smul.u32 2, %s62
    %p64 = scmp.eq.s32.totalorder 0, 0
    // Predicated region
    $region18: #{tpu_custom_call.1} parent=1 // pred_check
      %p65 = pneg %p64
    $region19: #{tpu_custom_call.1} parent=1 // pred_check_branch
      %67 = sbr.rel (%p65) target = $region21
    $region20: #{tpu_custom_call.1} parent=1 // pred_region
      %68 = vst [vmem:[#allocation2] sm:$0x1] 0.0
    $region21: #{tpu_custom_call.1} parent=1 // pred_fallthru
      _
    %v69 = vld [vmem:[#allocation3] sm:$0xff]
    %v70 = vld [vmem:[#allocation3 + $0x8] sm:$0xff]
    %v71 = vld [vmem:[#allocation6] sm:$0xff]
    %v72 = vld [vmem:[#allocation6 + $0x8] sm:$0xff]
    %v73 = vsub.f32 %v69, %v71
    %v74 = vsub.f32 %v70, %v72
    %v75 = vand.u32 2147483647, %v73
    %v76 = vand.u32 2147483647, %v74
    %vm77 = vcmp.lt.f32.partialorder %v75, 1.0
    %vm78 = vcmp.lt.f32.partialorder %v76, 1.0
    %v79 = vmul.f32 %v75, 0.5
    %v80 = vmul.f32 %v76, 0.5
    %v81 = vmul.f32 %v79, %v75
    %v82 = vmul.f32 %v80, %v76
    %v83 = vsub.f32 %v75, 0.5
    %v84 = vsub.f32 %v76, 0.5
    %v85 = vsel %vm77, %v81, %v83
    %v86 = vsel %vm78, %v82, %v84
    %s87 = sadd.s32 0, 0
    %v88 = vlaneseq
    %v89 = vshrl.u32 %v88, 7
    %v90 = vadd.s32 %v89, 8
    %s91 = smul.u32 %s87, 16
    %v92 = vstv %s91
    %v93 = vadd.s32 %v89, %v92
    %v94 = vadd.s32 %v90, %v92
    %v95 = vlaneseq
    %v96 = vand.u32 %v95, 127
    %vm97 = vcmp.lt.s32.totalorder %v93, 16
    %vm98 = vcmp.lt.s32.totalorder %v94, 16
    %vm99 = vcmp.eq.s32.totalorder %v93, 16
    %vm100 = vcmp.eq.s32.totalorder %v94, 16
    %vm101 = vcmp.lt.s32.totalorder %v96, 0
    %vm102 = vmand %vm99, %vm101
    %vm103 = vmand %vm100, %vm101
    %vm104 = vmor %vm97, %vm102
    %vm105 = vmor %vm98, %vm103
    %v106 = vsel %vm104, %v85, 0.0
    %v107 = vsel %vm105, %v86, 0.0
    %v108 = vld [vmem:[#allocation2] sm:$0x1]
    %v109 = vadd.f32 %v106, %v107
    %v110 = vrot.slane %v109, 4
    %v111 = vadd.f32 %v109, %v110
    %v112 = vrot.slane %v111, 2
    %v113 = vadd.f32 %v111, %v112
    %v114 = vrot.slane %v113, 1
    %v115 = vadd.f32 %v113, %v114
    %v116 = vadd.f32 %v108, %v115
    %117 = vst [vmem:[#allocation2] sm:$0x1] %v116
    // Predicated region
    $region22: #{tpu_custom_call.1} parent=1 // pred_check
      %p118 = pneg %p64
    $region23: #{tpu_custom_call.1} parent=1 // pred_check_branch
      %120 = sbr.rel (%p118) target = $region25
    $region24: #{tpu_custom_call.1} parent=1 // pred_region
      %v121 = vld [vmem:[#allocation2] sm:$0x1]
      %122 = vst [vmem:[#allocation8] sm:$0x1] %v121
    $region25: #{tpu_custom_call.1} parent=1 // pred_fallthru
      _
    // Predicated region
    $region26: #{tpu_custom_call.1} parent=1 // pred_check
      _
    $region27: #{tpu_custom_call.1} parent=1 // pred_check_branch
      %124 = sbr.rel (0) target = $region29
    $region28: #{tpu_custom_call.1} parent=1 // pred_region
      %126 = vsyncadd [#allocation5], 0
      %s128 = sshll.u32 [#allocation8], 4
      %s129 = int_to_ptr.vmem [resolvable:$true] %s128
      %s130 = sshll.u32 %s2, 4
      %s131 = int_to_ptr.hbm [resolvable:$true] %s130
      %133 = dma.vmem_to_hbm [thread:$0]  %s129, 16, %s131, [#allocation5]
    $region29: #{tpu_custom_call.1} parent=1 // pred_fallthru
      _
    // Predicated region
    $region30: #{tpu_custom_call.1} parent=1 // pred_check
      _
    $region31: #{tpu_custom_call.1} parent=1 // pred_check_branch
      %135 = sbr.rel (0) target = $region33
    $region32: #{tpu_custom_call.1} parent=1 // pred_region
      %137 = dma.done [#allocation5], 16
    $region33: #{tpu_custom_call.1} parent=1 // pred_fallthru
      _
    %138 = vsyncpa [#allocation4], 1
    %139 = vsyncpa [#allocation7], 1
    %140 = vsyncpa [#allocation5], 1

</llo_original>
